<compile_context>
chip_gen: v7x
topology: tpu7x:2x2x1
jax: 0.10.0
libtpu: 0.0.40
codegen_flags: <defaults>
</compile_context>

<pallas_src>
import math
import numpy as np
import jax
import jax.numpy as jnp
from jax.experimental import pallas as pl
from jax.experimental.pallas import tpu as pltpu


def _round_up(a, m):
    return ((a + m - 1) // m) * m


def make_ipnn_kernel(field_num, latent_dim, feat_num, temp, scaling, n_linear):
    """Fused gather + soft-mask + inner-product + MLP kernel (transposed)."""
    F, D, V = field_num, latent_dim, feat_num
    pairs = [(i, j) for i in range(F - 1) for j in range(i + 1, F)]

    def kernel(xT_ref, vals_ref, TgT_ref, W0T_ref, b0T_ref, *rest):
        out_ref = rest[-1]
        wb = rest[:-1]                     # (W1T, b1T, ..., W_last, b_last)

        # ---- exact integer one-hot (no selector matmul, no float equality) ----
        xi = xT_ref[...]                                               # (F, Bb) int32
        iota_v = vals_ref[...]                                         # (V, 1)  int32
        onehot = jnp.concatenate(
            [(xi[f:f + 1, :] == iota_v).astype(jnp.float32) for f in range(F)],
            axis=0)                                                    # (F*V, Bb)

        # ---- single stacked gather matmul: [emb table ; mask table ; pad] ----
        g = jnp.dot(TgT_ref[...], onehot,
                    preferred_element_type=jnp.float32)                # (Gr, Bb)

        # MaskEmbedding: embed * (scaling * sigmoid(temp * mask_weight[x])),
        # mask computed at field granularity then sublane-broadcast over D.
        m = scaling * jax.nn.sigmoid(temp * g[F * D:F * D + F, :])     # (F, Bb)
        xe_f = [g[f * D:(f + 1) * D, :] * m[f:f + 1, :] for f in range(F)]

        # ---- flat embeddings + pairwise products, one fused first Linear ----
        pieces = list(xe_f) + [xe_f[i] * xe_f[j] for (i, j) in pairs]
        z = jnp.concatenate(pieces, axis=0)                            # (F*D+P*D, Bb)
        h = (jnp.dot(W0T_ref[...], z, preferred_element_type=jnp.float32)
             + b0T_ref[...])                                           # (N0, Bb)

        if n_linear == 1:
            out_ref[...] = h
            return
        h = jnp.maximum(h, 0.0)

        # ---- hidden MLP layers (dropout identity, use_bn=False) ----
        for li in range(n_linear - 2):
            w = wb[2 * li][...]
            b = wb[2 * li + 1][...]
            h = jnp.maximum(
                jnp.dot(w, h, preferred_element_type=jnp.float32) + b, 0.0)

        # ---- final output layer (dout == 1): VPU multiply + sublane reduce ----
        w_last = wb[2 * (n_linear - 2)][...]                           # (d_last, 1)
        b_last = wb[2 * (n_linear - 2) + 1][...]                       # (1, 1)
        out_ref[...] = jnp.sum(w_last * h, axis=0, keepdims=True) + b_last

    return kernel


def make_masked_ipnn(params, field_num, *, temp=1.0, b_blk=2048):
    """Builds constants once per parameter set and returns a jitted forward."""
    emb = np.asarray(params["embedding"], np.float32)        # (V, D)
    mw = np.asarray(params["mask_weight"], np.float32)       # (V, 1)
    Ws = [np.asarray(w, np.float32) for w in params["weights"]]
    bs = [np.asarray(b, np.float32) for b in params["biases"]]
    mask_initial = float(params["mask_initial_value"])

    F = field_num
    V, D = emb.shape
    n_linear = len(Ws)
    scaling = 1.0 + math.exp(-mask_initial)                  # 1 / sigmoid(init)

    # ---- stacked gather table: [kron(I_F, emb.T) ; kron(I_F, mw.T) ; pad] ----
    eyeF = np.eye(F, dtype=np.float32)
    TembT = np.kron(eyeF, emb.T)                             # (F*D, F*V)
    TmwT = np.kron(eyeF, mw.T)                               # (F,   F*V)
    Gr = _round_up(F * D + F, 8)
    Tg = np.zeros((Gr, F * V), np.float32)
    Tg[:F * D] = TembT
    Tg[F * D:F * D + F] = TmwT

    vals = np.arange(V, dtype=np.int32).reshape(V, 1)

    # ---- first Linear: flat part + D-expanded IP part fused into one LHS ----
    W0 = Ws[0]                                               # (F*D + P, N0)
    W0T = np.concatenate([W0[:F * D].T,
                          np.repeat(W0[F * D:].T, D, axis=1)], axis=1)

    consts = [vals, Tg, W0T, bs[0].T]
    for l in range(1, n_linear - 1):
        consts += [Ws[l].T, bs[l].T]
    if n_linear > 1:
        consts += [Ws[-1], bs[-1].T]                         # last layer kept (din, 1)
    consts = [jnp.asarray(c) for c in consts]

    kernel = make_ipnn_kernel(F, D, V, float(temp), float(scaling), n_linear)

    @jax.jit
    def forward(x):
        B = x.shape[0]
        # Big lane-dense batch blocks; for small/medium B split so the grid has
        # >= 2 steps (v7x megacore); pad instead of asserting divisibility.
        if B <= 2 * b_blk:
            Bb = max(128, _round_up(-(-B // 2), 128))
        else:
            Bb = _round_up(b_blk, 128)
        B_pad = _round_up(B, Bb)
        nb = B_pad // Bb

        x_pad = jnp.pad(x.astype(jnp.int32), ((0, B_pad - B), (0, 0)))
        xT = x_pad.T                                         # (F, B_pad), batch in lanes

        in_specs = [pl.BlockSpec((F, Bb), lambda i: (0, i))]
        # Constants are whole-array blocks with a constant index_map: DMA'd once
        # and kept resident across grid steps.
        in_specs += [pl.BlockSpec(c.shape, lambda i: (0, 0)) for c in consts]
        out_spec = pl.BlockSpec((1, Bb), lambda i: (0, i))

        out = pl.pallas_call(
            kernel,
            out_shape=jax.ShapeDtypeStruct((1, B_pad), jnp.float32),
            grid_spec=pltpu.PrefetchScalarGridSpec(
                num_scalar_prefetch=0,
                grid=(nb,),
                in_specs=in_specs,
                out_specs=out_spec,
            ),
            compiler_params=pltpu.CompilerParams(
                dimension_semantics=("parallel",)),
        )(xT, *consts)

        return out[0, :B].reshape(B, 1)

    return forward


def init_params(key, feat_num, field_num, latent_dim, mlp_dims, mask_initial):
    dnn_dim = field_num * latent_dim + field_num * (field_num - 1) // 2
    n_linear = len(mlp_dims) + 1                      # hidden layers + output_layer
    keys = jax.random.split(key, 1 + 2 * n_linear)

    # MaskEmbedding.embedding: xavier_uniform_
    a = math.sqrt(6.0 / (feat_num + latent_dim))
    emb = jax.random.uniform(keys[0], (feat_num, latent_dim), jnp.float32, -a, a)
    # MaskEmbedding.mask_weight: constant_(mask_initial_value)
    mw = jnp.full((feat_num, 1), mask_initial, jnp.float32)

    dims = [dnn_dim] + list(mlp_dims) + [1]
    Ws, bs = [], []
    ki = 1
    for din, dout in zip(dims[:-1], dims[1:]):
        bound = 1.0 / math.sqrt(din)                  # PyTorch Linear default init
        Ws.append(jax.random.uniform(keys[ki], (din, dout), jnp.float32, -bound, bound))
        ki += 1
        bs.append(jax.random.uniform(keys[ki], (1, dout), jnp.float32, -bound, bound))
        ki += 1

    return {
        "embedding": emb,
        "mask_weight": mw,
        "weights": Ws,
        "biases": bs,
        "mask_initial_value": float(mask_initial),
    }


def reference_forward(x, params, temp=1.0):
    """Pure-JAX reference matching the PyTorch forward (eval mode)."""
    emb = params["embedding"]
    mw = params["mask_weight"]
    B, F = x.shape
    scaling = 1.0 / (1.0 / (1.0 + math.exp(-params["mask_initial_value"])))

    e = emb[x]                                            # (B, F, D)
    m = scaling * jax.nn.sigmoid(temp * mw[x])            # (B, F, 1)
    xe = e * m
    flat = xe.reshape(B, F * emb.shape[1])
    pairs = [(i, j) for i in range(F - 1) for j in range(i + 1, F)]
    ip = jnp.stack([jnp.sum(xe[:, i, :] * xe[:, j, :], axis=-1) for i, j in pairs],
                   axis=1)
    h = jnp.concatenate([flat, ip], axis=1)
    n = len(params["weights"])
    for li, (W, b) in enumerate(zip(params["weights"], params["biases"])):
        h = h @ W + b
        if li < n - 1:
            h = jnp.maximum(h, 0.0)
    return h


if __name__ == "__main__":
    # opt = {feat_num: 32, field_num: 4, latent_dim: 16, mlp_dims: (32, 16),
    #        mask_initial: 0.5, use_bn: False, mlp_dropout: 0.0}
    feat_num, field_num, latent_dim = 32, 4, 16
    mlp_dims = (32, 16)
    mask_initial = 0.5
    B = 16
    temp = 1.0

    key = jax.random.PRNGKey(0)
    k_params, k_x = jax.random.split(key)
    params = init_params(k_params, feat_num, field_num, latent_dim, mlp_dims,
                         mask_initial)
    x = jax.random.randint(k_x, (B, field_num), 0, feat_num, dtype=jnp.int32)

    forward = make_masked_ipnn(params, field_num, temp=temp)
    out = forward(x)
    out = jax.block_until_ready(out)

    ref = reference_forward(x, params, temp=temp)
    np.testing.assert_allclose(np.asarray(out), np.asarray(ref),
                               rtol=1e-3, atol=1e-4)
    print("KERNEL_OK")
</pallas_src>

<mosaic_0001>
module attributes {stable_mosaic.version = 11 : i64} {
  func.func @kernel(%arg0: i32, %arg1: memref<4x128xi32, #tpu.memory_space<vmem>>, %arg2: memref<32x1xi32, #tpu.memory_space<vmem>>, %arg3: memref<72x128xf32, #tpu.memory_space<vmem>>, %arg4: memref<32x160xf32, #tpu.memory_space<vmem>>, %arg5: memref<32x1xf32, #tpu.memory_space<vmem>>, %arg6: memref<16x32xf32, #tpu.memory_space<vmem>>, %arg7: memref<16x1xf32, #tpu.memory_space<vmem>>, %arg8: memref<16x1xf32, #tpu.memory_space<vmem>>, %arg9: memref<1x1xf32, #tpu.memory_space<vmem>>, %arg10: memref<1x128xf32, #tpu.memory_space<vmem>>) attributes {dimension_semantics = [#tpu.dimension_semantics<parallel>], iteration_bounds = array<i64: 1>, scalar_prefetch = 0 : i64, scratch_operands = 0 : i64, tpu.core_type = #tpu.core_type<tc>, window_params = [{transform_indices = @transform_0, window_bounds = array<i64: 4, 128>}, {pipeline_mode = #tpu.pipeline_mode<synchronous>, transform_indices = @transform_1, window_bounds = array<i64: 32, 1>}, {pipeline_mode = #tpu.pipeline_mode<synchronous>, transform_indices = @transform_2, window_bounds = array<i64: 72, 128>}, {pipeline_mode = #tpu.pipeline_mode<synchronous>, transform_indices = @transform_3, window_bounds = array<i64: 32, 160>}, {pipeline_mode = #tpu.pipeline_mode<synchronous>, transform_indices = @transform_4, window_bounds = array<i64: 32, 1>}, {pipeline_mode = #tpu.pipeline_mode<synchronous>, transform_indices = @transform_5, window_bounds = array<i64: 16, 32>}, {pipeline_mode = #tpu.pipeline_mode<synchronous>, transform_indices = @transform_6, window_bounds = array<i64: 16, 1>}, {pipeline_mode = #tpu.pipeline_mode<synchronous>, transform_indices = @transform_7, window_bounds = array<i64: 16, 1>}, {pipeline_mode = #tpu.pipeline_mode<synchronous>, transform_indices = @transform_8, window_bounds = array<i64: 1, 1>}, {transform_indices = @transform_9, window_bounds = array<i64: 1, 128>}]} {
    %c0 = arith.constant 0 : index
    %c0_0 = arith.constant 0 : index
    %0 = vector.load %arg1[%c0, %c0_0] : memref<4x128xi32, #tpu.memory_space<vmem>>, vector<4x128xi32>
    %c0_1 = arith.constant 0 : index
    %c0_2 = arith.constant 0 : index
    %1 = vector.load %arg2[%c0_1, %c0_2] : memref<32x1xi32, #tpu.memory_space<vmem>>, vector<32x1xi32>
    %2 = vector.extract_strided_slice %0 {offsets = [0, 0], sizes = [1, 128], strides = [1, 1]} : vector<4x128xi32> to vector<1x128xi32>
    %3 = vector.broadcast %2 : vector<1x128xi32> to vector<32x128xi32>
    %4 = vector.broadcast %1 : vector<32x1xi32> to vector<32x128xi32>
    %5 = arith.cmpi eq, %3, %4 : vector<32x128xi32>
    %6 = arith.extui %5 : vector<32x128xi1> to vector<32x128xi32>
    %7 = arith.sitofp %6 : vector<32x128xi32> to vector<32x128xf32>
    %8 = vector.extract_strided_slice %0 {offsets = [1, 0], sizes = [1, 128], strides = [1, 1]} : vector<4x128xi32> to vector<1x128xi32>
    %9 = vector.broadcast %8 : vector<1x128xi32> to vector<32x128xi32>
    %10 = vector.broadcast %1 : vector<32x1xi32> to vector<32x128xi32>
    %11 = arith.cmpi eq, %9, %10 : vector<32x128xi32>
    %12 = arith.extui %11 : vector<32x128xi1> to vector<32x128xi32>
    %13 = arith.sitofp %12 : vector<32x128xi32> to vector<32x128xf32>
    %14 = vector.extract_strided_slice %0 {offsets = [2, 0], sizes = [1, 128], strides = [1, 1]} : vector<4x128xi32> to vector<1x128xi32>
    %15 = vector.broadcast %14 : vector<1x128xi32> to vector<32x128xi32>
    %16 = vector.broadcast %1 : vector<32x1xi32> to vector<32x128xi32>
    %17 = arith.cmpi eq, %15, %16 : vector<32x128xi32>
    %18 = arith.extui %17 : vector<32x128xi1> to vector<32x128xi32>
    %19 = arith.sitofp %18 : vector<32x128xi32> to vector<32x128xf32>
    %20 = vector.extract_strided_slice %0 {offsets = [3, 0], sizes = [1, 128], strides = [1, 1]} : vector<4x128xi32> to vector<1x128xi32>
    %21 = vector.broadcast %20 : vector<1x128xi32> to vector<32x128xi32>
    %22 = vector.broadcast %1 : vector<32x1xi32> to vector<32x128xi32>
    %23 = arith.cmpi eq, %21, %22 : vector<32x128xi32>
    %24 = arith.extui %23 : vector<32x128xi1> to vector<32x128xi32>
    %25 = arith.sitofp %24 : vector<32x128xi32> to vector<32x128xf32>
    %26 = tpu.concatenate %7, %13, %19, %25 in 0 : vector<32x128xf32>, vector<32x128xf32>, vector<32x128xf32>, vector<32x128xf32> -> vector<128x128xf32>
    %c0_3 = arith.constant 0 : index
    %c0_4 = arith.constant 0 : index
    %27 = vector.load %arg3[%c0_3, %c0_4] : memref<72x128xf32, #tpu.memory_space<vmem>>, vector<72x128xf32>
    %cst = arith.constant dense<0.000000e+00> : vector<72x128xf32>
    %28 = tpu.matmul %27, %26, %cst {dimension_numbers = #tpu.dot_dimension_numbers<[1], [0], [0], [1], [0, 0, 1, 1], [], []>} : vector<72x128xf32>, vector<128x128xf32>, vector<72x128xf32> -> vector<72x128xf32>
    %29 = vector.extract_strided_slice %28 {offsets = [64, 0], sizes = [4, 128], strides = [1, 1]} : vector<72x128xf32> to vector<4x128xf32>
    %cst_5 = arith.constant 1.000000e+00 : f32
    %30 = vector.broadcast %cst_5 : f32 to vector<4x128xf32>
    %31 = arith.mulf %30, %29 : vector<4x128xf32>
    %32 = arith.negf %31 : vector<4x128xf32>
    %33 = math.exp %32 : vector<4x128xf32>
    %cst_6 = arith.constant 1.000000e+00 : f32
    %34 = vector.broadcast %cst_6 : f32 to vector<4x128xf32>
    %35 = arith.addf %34, %33 : vector<4x128xf32>
    %36 = arith.divf %34, %35 : vector<4x128xf32>
    %cst_7 = arith.constant 1.60653067 : f32
    %37 = vector.broadcast %cst_7 : f32 to vector<4x128xf32>
    %38 = arith.mulf %37, %36 : vector<4x128xf32>
    %39 = vector.extract_strided_slice %28 {offsets = [0, 0], sizes = [16, 128], strides = [1, 1]} : vector<72x128xf32> to vector<16x128xf32>
    %40 = vector.extract_strided_slice %38 {offsets = [0, 0], sizes = [1, 128], strides = [1, 1]} : vector<4x128xf32> to vector<1x128xf32>
    %41 = vector.broadcast %40 : vector<1x128xf32> to vector<16x128xf32>
    %42 = arith.mulf %39, %41 : vector<16x128xf32>
    %43 = vector.extract_strided_slice %28 {offsets = [16, 0], sizes = [16, 128], strides = [1, 1]} : vector<72x128xf32> to vector<16x128xf32>
    %44 = vector.extract_strided_slice %38 {offsets = [1, 0], sizes = [1, 128], strides = [1, 1]} : vector<4x128xf32> to vector<1x128xf32>
    %45 = vector.broadcast %44 : vector<1x128xf32> to vector<16x128xf32>
    %46 = arith.mulf %43, %45 : vector<16x128xf32>
    %47 = vector.extract_strided_slice %28 {offsets = [32, 0], sizes = [16, 128], strides = [1, 1]} : vector<72x128xf32> to vector<16x128xf32>
    %48 = vector.extract_strided_slice %38 {offsets = [2, 0], sizes = [1, 128], strides = [1, 1]} : vector<4x128xf32> to vector<1x128xf32>
    %49 = vector.broadcast %48 : vector<1x128xf32> to vector<16x128xf32>
    %50 = arith.mulf %47, %49 : vector<16x128xf32>
    %51 = vector.extract_strided_slice %28 {offsets = [48, 0], sizes = [16, 128], strides = [1, 1]} : vector<72x128xf32> to vector<16x128xf32>
    %52 = vector.extract_strided_slice %38 {offsets = [3, 0], sizes = [1, 128], strides = [1, 1]} : vector<4x128xf32> to vector<1x128xf32>
    %53 = vector.broadcast %52 : vector<1x128xf32> to vector<16x128xf32>
    %54 = arith.mulf %51, %53 : vector<16x128xf32>
    %55 = arith.mulf %42, %46 : vector<16x128xf32>
    %56 = arith.mulf %42, %50 : vector<16x128xf32>
    %57 = arith.mulf %42, %54 : vector<16x128xf32>
    %58 = arith.mulf %46, %50 : vector<16x128xf32>
    %59 = arith.mulf %46, %54 : vector<16x128xf32>
    %60 = arith.mulf %50, %54 : vector<16x128xf32>
    %61 = tpu.concatenate %42, %46, %50, %54, %55, %56, %57, %58, %59, %60 in 0 : vector<16x128xf32>, vector<16x128xf32>, vector<16x128xf32>, vector<16x128xf32>, vector<16x128xf32>, vector<16x128xf32>, vector<16x128xf32>, vector<16x128xf32>, vector<16x128xf32>, vector<16x128xf32> -> vector<160x128xf32>
    %c0_8 = arith.constant 0 : index
    %c0_9 = arith.constant 0 : index
    %62 = vector.load %arg4[%c0_8, %c0_9] : memref<32x160xf32, #tpu.memory_space<vmem>>, vector<32x160xf32>
    %cst_10 = arith.constant dense<0.000000e+00> : vector<32x128xf32>
    %63 = tpu.matmul %62, %61, %cst_10 {dimension_numbers = #tpu.dot_dimension_numbers<[1], [0], [0], [1], [0, 0, 1, 1], [], []>} : vector<32x160xf32>, vector<160x128xf32>, vector<32x128xf32> -> vector<32x128xf32>
    %c0_11 = arith.constant 0 : index
    %c0_12 = arith.constant 0 : index
    %64 = vector.load %arg5[%c0_11, %c0_12] : memref<32x1xf32, #tpu.memory_space<vmem>>, vector<32x1xf32>
    %65 = vector.broadcast %64 : vector<32x1xf32> to vector<32x128xf32>
    %66 = arith.addf %63, %65 : vector<32x128xf32>
    %cst_13 = arith.constant 0.000000e+00 : f32
    %67 = vector.broadcast %cst_13 : f32 to vector<32x128xf32>
    %68 = arith.maximumf %66, %67 : vector<32x128xf32>
    %c0_14 = arith.constant 0 : index
    %c0_15 = arith.constant 0 : index
    %69 = vector.load %arg6[%c0_14, %c0_15] : memref<16x32xf32, #tpu.memory_space<vmem>>, vector<16x32xf32>
    %c0_16 = arith.constant 0 : index
    %c0_17 = arith.constant 0 : index
    %70 = vector.load %arg7[%c0_16, %c0_17] : memref<16x1xf32, #tpu.memory_space<vmem>>, vector<16x1xf32>
    %cst_18 = arith.constant dense<0.000000e+00> : vector<16x128xf32>
    %71 = tpu.matmul %69, %68, %cst_18 {dimension_numbers = #tpu.dot_dimension_numbers<[1], [0], [0], [1], [0, 0, 1, 1], [], []>} : vector<16x32xf32>, vector<32x128xf32>, vector<16x128xf32> -> vector<16x128xf32>
    %72 = vector.broadcast %70 : vector<16x1xf32> to vector<16x128xf32>
    %73 = arith.addf %71, %72 : vector<16x128xf32>
    %cst_19 = arith.constant 0.000000e+00 : f32
    %74 = vector.broadcast %cst_19 : f32 to vector<16x128xf32>
    %75 = arith.maximumf %73, %74 : vector<16x128xf32>
    %c0_20 = arith.constant 0 : index
    %c0_21 = arith.constant 0 : index
    %76 = vector.load %arg8[%c0_20, %c0_21] : memref<16x1xf32, #tpu.memory_space<vmem>>, vector<16x1xf32>
    %c0_22 = arith.constant 0 : index
    %c0_23 = arith.constant 0 : index
    %77 = vector.load %arg9[%c0_22, %c0_23] : memref<1x1xf32, #tpu.memory_space<vmem>>, vector<1x1xf32>
    %78 = vector.broadcast %76 : vector<16x1xf32> to vector<16x128xf32>
    %79 = arith.mulf %78, %75 : vector<16x128xf32>
    %cst_24 = arith.constant dense<0.000000e+00> : vector<128xf32>
    %80 = vector.multi_reduction <add>, %79, %cst_24 [0] : vector<16x128xf32> to vector<128xf32>
    %81 = vector.shape_cast %80 : vector<128xf32> to vector<1x128xf32>
    %82 = vector.broadcast %77 : vector<1x1xf32> to vector<1x128xf32>
    %83 = arith.addf %81, %82 : vector<1x128xf32>
    %c0_25 = arith.constant 0 : index
    %c0_26 = arith.constant 0 : index
    %84 = vector.load %arg10[%c0_25, %c0_26] : memref<1x128xf32, #tpu.memory_space<vmem>>, vector<1x128xf32>
    tpu.vector_store %arg10[%c0_25, %c0_26], %83 {strides = array<i32>} : memref<1x128xf32, #tpu.memory_space<vmem>>, vector<1x128xf32>,
    return
  }
  func.func @transform_0(%arg0: i32) -> (i32, i32) {
    %c0_i32 = arith.constant 0 : i32
    %c0_i32_0 = arith.constant 0 : i32
    return %c0_i32, %arg0 : i32, i32
  }
  func.func @transform_1(%arg0: i32) -> (i32, i32) {
    %c0_i32 = arith.constant 0 : i32
    %c0_i32_0 = arith.constant 0 : i32
    %c0_i32_1 = arith.constant 0 : i32
    return %c0_i32, %c0_i32_0 : i32, i32
  }
  func.func @transform_2(%arg0: i32) -> (i32, i32) {
    %c0_i32 = arith.constant 0 : i32
    %c0_i32_0 = arith.constant 0 : i32
    %c0_i32_1 = arith.constant 0 : i32
    return %c0_i32, %c0_i32_0 : i32, i32
  }
  func.func @transform_3(%arg0: i32) -> (i32, i32) {
    %c0_i32 = arith.constant 0 : i32
    %c0_i32_0 = arith.constant 0 : i32
    %c0_i32_1 = arith.constant 0 : i32
    return %c0_i32, %c0_i32_0 : i32, i32
  }
  func.func @transform_4(%arg0: i32) -> (i32, i32) {
    %c0_i32 = arith.constant 0 : i32
    %c0_i32_0 = arith.constant 0 : i32
    %c0_i32_1 = arith.constant 0 : i32
    return %c0_i32, %c0_i32_0 : i32, i32
  }
  func.func @transform_5(%arg0: i32) -> (i32, i32) {
    %c0_i32 = arith.constant 0 : i32
    %c0_i32_0 = arith.constant 0 : i32
    %c0_i32_1 = arith.constant 0 : i32
    return %c0_i32, %c0_i32_0 : i32, i32
  }
  func.func @transform_6(%arg0: i32) -> (i32, i32) {
    %c0_i32 = arith.constant 0 : i32
    %c0_i32_0 = arith.constant 0 : i32
    %c0_i32_1 = arith.constant 0 : i32
    return %c0_i32, %c0_i32_0 : i32, i32
  }
  func.func @transform_7(%arg0: i32) -> (i32, i32) {
    %c0_i32 = arith.constant 0 : i32
    %c0_i32_0 = arith.constant 0 : i32
    %c0_i32_1 = arith.constant 0 : i32
    return %c0_i32, %c0_i32_0 : i32, i32
  }
  func.func @transform_8(%arg0: i32) -> (i32, i32) {
    %c0_i32 = arith.constant 0 : i32
    %c0_i32_0 = arith.constant 0 : i32
    %c0_i32_1 = arith.constant 0 : i32
    return %c0_i32, %c0_i32_0 : i32, i32
  }
  func.func @transform_9(%arg0: i32) -> (i32, i32) {
    %c0_i32 = arith.constant 0 : i32
    %c0_i32_0 = arith.constant 0 : i32
    return %c0_i32, %arg0 : i32, i32
  }
}

</mosaic_0001>

<llo_original>
// kernel: forward.1
$region0: #{forward.1}
  #allocation0 [shape = 'u32[]', space=smem, size = 0x4, offset = 0x4, fixed_abs, tag = 'smem constant byte address 0x4 - core index']
  #allocation1 [shape = 'u32[144,128]{1,0:T(1,128)}', space=vmem, size = 0x12000, scoped, tag = 'internal scratch']
  #allocation2 [shape = 'f32[1,1]{1,0:T(1,128)S(1)}', space=vmem, size = 0x200, scoped, tag = 'scoped memory for forward.1']
  %s0 = inlined_call_operand.vmem [shape: s32[4,128], index: 0, kind: input, shape index: {}]
  %s1 = inlined_call_operand.hbm [shape: s32[32,1], index: 1, kind: input, shape index: {}]
  %s2 = inlined_call_operand.hbm [shape: f32[72,128], index: 2, kind: input, shape index: {}]
  %s3 = inlined_call_operand.hbm [shape: f32[32,160], index: 3, kind: input, shape index: {}]
  %s4 = inlined_call_operand.hbm [shape: f32[32,1], index: 4, kind: input, shape index: {}]
  %s5 = inlined_call_operand.hbm [shape: f32[16,32], index: 5, kind: input, shape index: {}]
  %s6 = inlined_call_operand.hbm [shape: f32[16,1], index: 6, kind: input, shape index: {}]
  %s7 = inlined_call_operand.vmem [shape: f32[16,1], index: 7, kind: input, shape index: {}]
  %s8 = inlined_call_operand.<no memory space> [shape: f32[1,1], index: 8, kind: input, shape index: {}]
  %s9 = inlined_call_operand.vmem [shape: f32[1,128], index: 9, kind: output, shape index: {}]
  %s10 = sld [smem:[#allocation0]]
  $region70: #{forward.1} parent=0
    _
  %s12 = ssub.s32 1, %s10
  %s13 = scalar_select 0, %s12, %s10
  %v14 = vstv %s8
  %15 = vst [vmem:[#allocation2] sm:$0x1] %v14
  $region1: #{forward.1} parent=0
    #allocation3 [shape = 'u8[16384]{0}', space=vmem, size = 0x4000, scoped, tag = 'input window, operand 1, single buffered']
    #allocation4 [shape = 's32[1]{0}', space=sflag, size = 0x4, scoped, tag = 'scoped memory for forward.1']
    #allocation5 [shape = 'u8[36864]{0}', space=vmem, size = 0x9000, scoped, tag = 'input window, operand 2, single buffered']
    #allocation6 [shape = 's32[1]{0}', space=sflag, size = 0x4, scoped, tag = 'scoped memory for forward.1']
    #allocation7 [shape = 'u8[32768]{0}', space=vmem, size = 0x8000, scoped, tag = 'input window, operand 3, single buffered']
    #allocation8 [shape = 'u8[16384]{0}', space=vmem, size = 0x4000, scoped, tag = 'input window, operand 4, single buffered']
    #allocation9 [shape = 's32[1]{0}', space=sflag, size = 0x4, scoped, tag = 'scoped memory for forward.1']
    #allocation10 [shape = 'u8[8192]{0}', space=vmem, size = 0x2000, scoped, tag = 'input window, operand 5, single buffered']
    #allocation11 [shape = 'u8[8192]{0}', space=vmem, size = 0x2000, scoped, tag = 'input window, operand 6, single buffered']
    #allocation12 [shape = 's32[1]{0}', space=sflag, size = 0x4, scoped, tag = 'scoped memory for forward.1']
    %16 = vsyncpa [#allocation4], 0
    %17 = vsyncpa [#allocation6], 0
    %18 = vsyncpa [#allocation9], 0
    %19 = vsyncpa [#allocation12], 0
    // Predicated region
    $region2: #{forward.1} parent=1 // pred_check
      _
    $region3: #{forward.1} parent=1 // pred_check_branch
      %21 = sbr.rel (0) target = $region5
    $region4: #{forward.1} parent=1 // pred_region
      _
    $region5: #{forward.1} parent=1 // pred_fallthru
      _
    // Predicated region
    $region6: #{forward.1} parent=1 // pred_check
      _
    $region7: #{forward.1} parent=1 // pred_check_branch
      %23 = sbr.rel (0) target = $region9
    $region8: #{forward.1} parent=1 // pred_region
      %s25 = ssub.s32 512, 512
      %26 = vsyncadd [#allocation4], %s25
      %s27 = sshll.u32 [#allocation3], 4
      %s28 = int_to_ptr.vmem [resolvable:$true] %s27
      %33 = dma.hbm_to_vmem [thread:$0]  %s1, 512, %s28, [#allocation4], 128, 128, 8
    $region9: #{forward.1} parent=1 // pred_fallthru
      _
    // Predicated region
    $region10: #{forward.1} parent=1 // pred_check
      _
    $region11: #{forward.1} parent=1 // pred_check_branch
      %35 = sbr.rel (0) target = $region13
    $region12: #{forward.1} parent=1 // pred_region
      %s37 = ssub.s32 1152, 1152
      %38 = vsyncadd [#allocation6], %s37
      %s39 = sshll.u32 [#allocation5], 4
      %s40 = int_to_ptr.vmem [resolvable:$true] %s39
      %45 = dma.hbm_to_vmem [thread:$0]  %s2, 1152, %s40, [#allocation6], 128, 128, 8
    $region13: #{forward.1} parent=1 // pred_fallthru
      _
    // Predicated region
    $region14: #{forward.1} parent=1 // pred_check
      _
    $region15: #{forward.1} parent=1 // pred_check_branch
      %47 = sbr.rel (0) target = $region17
    $region16: #{forward.1} parent=1 // pred_region
      %s49 = ssub.s32 1024, 1024
      %50 = vsyncadd [#allocation6], %s49
      %s51 = sshll.u32 [#allocation7], 4
      %s52 = int_to_ptr.vmem [resolvable:$true] %s51
      %57 = dma.hbm_to_vmem [thread:$0]  %s3, 1024, %s52, [#allocation6], 256, 256, 16
    $region17: #{forward.1} parent=1 // pred_fallthru
      _
    // Predicated region
    $region18: #{forward.1} parent=1 // pred_check
      _
    $region19: #{forward.1} parent=1 // pred_check_branch
      %59 = sbr.rel (0) target = $region21
    $region20: #{forward.1} parent=1 // pred_region
      %s61 = ssub.s32 512, 512
      %62 = vsyncadd [#allocation9], %s61
      %s63 = sshll.u32 [#allocation8], 4
      %s64 = int_to_ptr.vmem [resolvable:$true] %s63
      %69 = dma.hbm_to_vmem [thread:$0]  %s4, 512, %s64, [#allocation9], 128, 128, 8
    $region21: #{forward.1} parent=1 // pred_fallthru
      _
    // Predicated region
    $region22: #{forward.1} parent=1 // pred_check
      _
    $region23: #{forward.1} parent=1 // pred_check_branch
      %71 = sbr.rel (0) target = $region25
    $region24: #{forward.1} parent=1 // pred_region
      %s73 = ssub.s32 256, 256
      %74 = vsyncadd [#allocation9], %s73
      %s75 = sshll.u32 [#allocation10], 4
      %s76 = int_to_ptr.vmem [resolvable:$true] %s75
      %81 = dma.hbm_to_vmem [thread:$0]  %s5, 256, %s76, [#allocation9], 128, 128, 8
    $region25: #{forward.1} parent=1 // pred_fallthru
      _
    // Predicated region
    $region26: #{forward.1} parent=1 // pred_check
      _
    $region27: #{forward.1} parent=1 // pred_check_branch
      %83 = sbr.rel (0) target = $region29
    $region28: #{forward.1} parent=1 // pred_region
      %s85 = ssub.s32 256, 256
      %86 = vsyncadd [#allocation12], %s85
      %s87 = sshll.u32 [#allocation11], 4
      %s88 = int_to_ptr.vmem [resolvable:$true] %s87
      %93 = dma.hbm_to_vmem [thread:$0]  %s6, 256, %s88, [#allocation12], 128, 128, 8
    $region29: #{forward.1} parent=1 // pred_fallthru
      _
    // Predicated region
    $region30: #{forward.1} parent=1 // pred_check
      _
    $region31: #{forward.1} parent=1 // pred_check_branch
      %95 = sbr.rel (0) target = $region33
    $region32: #{forward.1} parent=1 // pred_region
      _
    $region33: #{forward.1} parent=1 // pred_fallthru
      _
    // Predicated region
    $region34: #{forward.1} parent=1 // pred_check
      _
    $region35: #{forward.1} parent=1 // pred_check_branch
      %97 = sbr.rel (0) target = $region37
    $region36: #{forward.1} parent=1 // pred_region
      _
    $region37: #{forward.1} parent=1 // pred_fallthru
      _
    // Predicated region
    $region38: #{forward.1} parent=1 // pred_check
      _
    $region39: #{forward.1} parent=1 // pred_check_branch
      %99 = sbr.rel (0) target = $region41
    $region40: #{forward.1} parent=1 // pred_region
      %100 = dma.done [#allocation4], 512
    $region41: #{forward.1} parent=1 // pred_fallthru
      _
    // Predicated region
    $region42: #{forward.1} parent=1 // pred_check
      _
    $region43: #{forward.1} parent=1 // pred_check_branch
      %102 = sbr.rel (0) target = $region45
    $region44: #{forward.1} parent=1 // pred_region
      %103 = dma.done [#allocation6], 1152
    $region45: #{forward.1} parent=1 // pred_fallthru
      _
    // Predicated region
    $region46: #{forward.1} parent=1 // pred_check
      _
    $region47: #{forward.1} parent=1 // pred_check_branch
      %105 = sbr.rel (0) target = $region49
    $region48: #{forward.1} parent=1 // pred_region
      %106 = dma.done [#allocation6], 1024
    $region49: #{forward.1} parent=1 // pred_fallthru
      _
    // Predicated region
    $region50: #{forward.1} parent=1 // pred_check
      _
    $region51: #{forward.1} parent=1 // pred_check_branch
      %108 = sbr.rel (0) target = $region53
    $region52: #{forward.1} parent=1 // pred_region
      %109 = dma.done [#allocation9], 512
    $region53: #{forward.1} parent=1 // pred_fallthru
      _
    // Predicated region
    $region54: #{forward.1} parent=1 // pred_check
      _
    $region55: #{forward.1} parent=1 // pred_check_branch
      %111 = sbr.rel (0) target = $region57
    $region56: #{forward.1} parent=1 // pred_region
      %112 = dma.done [#allocation9], 256
    $region57: #{forward.1} parent=1 // pred_fallthru
      _
    // Predicated region
    $region58: #{forward.1} parent=1 // pred_check
      _
    $region59: #{forward.1} parent=1 // pred_check_branch
      %114 = sbr.rel (0) target = $region61
    $region60: #{forward.1} parent=1 // pred_region
      %115 = dma.done [#allocation12], 256
    $region61: #{forward.1} parent=1 // pred_fallthru
      _
    %v116 = vld [vmem:[%s0] sm:$0xf]
    %v117 = vld [vmem:[#allocation3] sm:$0xff]
    %v118 = vld [vmem:[#allocation3 + $0x8] sm:$0xff]
    %v119 = vld [vmem:[#allocation3 + $0x10] sm:$0xff]
    %v120 = vld [vmem:[#allocation3 + $0x18] sm:$0xff]
    %v121 = vlaneseq
    %v122 = vshrl.u32 %v121, 7
    %v123 = vsub.s32 0, %v122
    %v124 = vrot.slane %v116, %v123
    %125 = vset.pattern.permute.xlu0 0
    %126 = vperm.xlu0 %125, %v117
    %v127 = vpop.permute.xlu0 %126
    %128 = vset.pattern.permute.xlu0 0
    %129 = vperm.xlu0 %128, %v118
    %v130 = vpop.permute.xlu0 %129
    %131 = vset.pattern.permute.xlu0 0
    %132 = vperm.xlu0 %131, %v119
    %v133 = vpop.permute.xlu0 %132
    %134 = vset.pattern.permute.xlu0 0
    %135 = vperm.xlu0 %134, %v120
    %v136 = vpop.permute.xlu0 %135
    %vm137 = vcmp.eq.s32.totalorder %v124, %v127
    %vm138 = vcmp.eq.s32.totalorder %v124, %v130
    %vm139 = vcmp.eq.s32.totalorder %v124, %v133
    %vm140 = vcmp.eq.s32.totalorder %v124, %v136
    %v141 = vsel %vm137, 1, 0
    %v142 = vsel %vm138, 1, 0
    %v143 = vsel %vm139, 1, 0
    %v144 = vsel %vm140, 1, 0
    %v145 = vcvt.s32.f32 %v141
    %v146 = vcvt.s32.f32 %v142
    %v147 = vcvt.s32.f32 %v143
    %v148 = vcvt.s32.f32 %v144
    %v149 = vlaneseq
    %v150 = vshrl.u32 %v149, 7
    %v151 = vsub.s32 1, %v150
    %v152 = vrot.slane %v116, %v151
    %vm153 = vcmp.eq.s32.totalorder %v152, %v127
    %vm154 = vcmp.eq.s32.totalorder %v152, %v130
    %vm155 = vcmp.eq.s32.totalorder %v152, %v133
    %vm156 = vcmp.eq.s32.totalorder %v152, %v136
    %v157 = vsel %vm153, 1, 0
    %v158 = vsel %vm154, 1, 0
    %v159 = vsel %vm155, 1, 0
    %v160 = vsel %vm156, 1, 0
    %v161 = vcvt.s32.f32 %v157
    %v162 = vcvt.s32.f32 %v158
    %v163 = vcvt.s32.f32 %v159
    %v164 = vcvt.s32.f32 %v160
    %v165 = vlaneseq
    %v166 = vshrl.u32 %v165, 7
    %v167 = vsub.s32 2, %v166
    %v168 = vrot.slane %v116, %v167
    %vm169 = vcmp.eq.s32.totalorder %v168, %v127
    %vm170 = vcmp.eq.s32.totalorder %v168, %v130
    %vm171 = vcmp.eq.s32.totalorder %v168, %v133
    %vm172 = vcmp.eq.s32.totalorder %v168, %v136
    %v173 = vsel %vm169, 1, 0
    %v174 = vsel %vm170, 1, 0
    %v175 = vsel %vm171, 1, 0
    %v176 = vsel %vm172, 1, 0
    %v177 = vcvt.s32.f32 %v173
    %v178 = vcvt.s32.f32 %v174
    %v179 = vcvt.s32.f32 %v175
    %v180 = vcvt.s32.f32 %v176
    %v181 = vlaneseq
    %v182 = vshrl.u32 %v181, 7
    %v183 = vsub.s32 3, %v182
    %v184 = vrot.slane %v116, %v183
    %vm185 = vcmp.eq.s32.totalorder %v184, %v127
    %vm186 = vcmp.eq.s32.totalorder %v184, %v130
    %vm187 = vcmp.eq.s32.totalorder %v184, %v133
    %vm188 = vcmp.eq.s32.totalorder %v184, %v136
    %v189 = vsel %vm185, 1, 0
    %v190 = vsel %vm186, 1, 0
    %v191 = vsel %vm187, 1, 0
    %v192 = vsel %vm188, 1, 0
    %v193 = vcvt.s32.f32 %v189
    %v194 = vcvt.s32.f32 %v190
    %v195 = vcvt.s32.f32 %v191
    %v196 = vcvt.s32.f32 %v192
    %v197 = vld [vmem:[#allocation5] sm:$0xff]
    %v198 = vld [vmem:[#allocation5 + $0x8] sm:$0xff]
    %v199 = vld [vmem:[#allocation5 + $0x10] sm:$0xff]
    %v200 = vld [vmem:[#allocation5 + $0x18] sm:$0xff]
    %v201 = vld [vmem:[#allocation5 + $0x20] sm:$0xff]
    %v202 = vld [vmem:[#allocation5 + $0x28] sm:$0xff]
    %v203 = vld [vmem:[#allocation5 + $0x30] sm:$0xff]
    %v204 = vld [vmem:[#allocation5 + $0x38] sm:$0xff]
    %v205 = vld [vmem:[#allocation5 + $0x40] sm:$0xff]
    %206 = vmatprep.subr.mxu0 0.0
    %207 = vmatpush1.msra.mxu0 %v145
    %208 = vmatprep.subr.mxu0 0.0
    %209 = vmatpush1.msra.mxu0 %v146
    %210 = vmatprep.subr.mxu0 0.0
    %211 = vmatpush1.msra.mxu0 %v147
    %212 = vmatprep.subr.mxu0 0.0
    %213 = vmatpush1.msra.mxu0 %v148
    %214 = vmatprep.subr.mxu0 0.0
    %215 = vmatpush1.msra.mxu0 %v161
    %216 = vmatprep.subr.mxu0 0.0
    %217 = vmatpush1.msra.mxu0 %v162
    %218 = vmatprep.subr.mxu0 0.0
    %219 = vmatpush1.msra.mxu0 %v163
    %220 = vmatprep.subr.mxu0 0.0
    %221 = vmatpush1.msra.mxu0 %v164
    %222 = vmatprep.subr.mxu0 0.0
    %223 = vmatpush1.msra.mxu0 %v177
    %224 = vmatprep.subr.mxu0 0.0
    %225 = vmatpush1.msra.mxu0 %v178
    %226 = vmatprep.subr.mxu0 0.0
    %227 = vmatpush1.msra.mxu0 %v179
    %228 = vmatprep.subr.mxu0 0.0
    %229 = vmatpush1.msra.mxu0 %v180
    %230 = vmatprep.subr.mxu0 0.0
    %231 = vmatpush1.msra.mxu0 %v193
    %232 = vmatprep.subr.mxu0 0.0
    %233 = vmatpush1.msra.mxu0 %v194
    %234 = vmatprep.subr.mxu0 0.0
    %235 = vmatpush1.msra.mxu0 %v195
    %236 = vmatprep.subr.mxu0 0.0
    %237 = vmatpush1.msra.mxu0 %v196
    %238 = vmatprep.subr.mxu0 0.0
    %239 = vmatpush1.msra.mxu0 0.0
    %240 = vmatprep.subr.mxu0 0.0
    %241 = vmatpush1.msra.mxu0 0.0
    %242 = vmatprep.subr.mxu0 0.0
    %243 = vmatpush1.msra.mxu0 0.0
    %244 = vmatprep.subr.mxu0 0.0
    %245 = vmatpush1.msra.mxu0 0.0
    %246 = vmatprep.subr.mxu0 0.0
    %247 = vmatpush1.msra.mxu0 0.0
    %248 = vmatprep.subr.mxu0 0.0
    %249 = vmatpush1.msra.mxu0 0.0
    %250 = vmatprep.subr.mxu0 0.0
    %251 = vmatpush1.msra.mxu0 0.0
    %252 = vmatprep.subr.mxu0 0.0
    %253 = vmatpush1.msra.mxu0 0.0
    %254 = vmatprep.subr.mxu0 0.0
    %255 = vmatpush1.msra.mxu0 0.0
    %256 = vmatprep.subr.mxu0 0.0
    %257 = vmatpush1.msra.mxu0 0.0
    %258 = vmatprep.subr.mxu0 0.0
    %259 = vmatpush1.msra.mxu0 0.0
    %260 = vmatprep.subr.mxu0 0.0
    %261 = vmatpush1.msra.mxu0 0.0
    %262 = vmatprep.subr.mxu0 0.0
    %263 = vmatpush1.msra.mxu0 0.0
    %264 = vmatprep.subr.mxu0 0.0
    %265 = vmatpush1.msra.mxu0 0.0
    %266 = vmatprep.subr.mxu0 0.0
    %267 = vmatpush1.msra.mxu0 0.0
    %268 = vmatprep.subr.mxu0 0.0
    %269 = vmatpush1.msra.mxu0 0.0
    %270 = vmatprep.mubr.f32.mxu0 0.0
    %271 = vmatmul.mubr.f32.gmra.mrb[0].mxu0 %v197
    %v272 = vpop.f32.mrb[0].mxu0
    %v273 = vadd.f32 0.0, %v272
    %v274 = vpop.f32.mrb[0].mxu0
    %275 = vmatprep.mubr.f32.mxu0 0.0
    %276 = vmatmul.mubr.f32.gmra.mrb[0].mxu0 %v198
    %v277 = vpop.f32.mrb[0].mxu0
    %v278 = vadd.f32 0.0, %v277
    %v279 = vpop.f32.mrb[0].mxu0
    %280 = vmatprep.mubr.f32.mxu0 0.0
    %281 = vmatmul.mubr.f32.gmra.mrb[0].mxu0 %v199
    %v282 = vpop.f32.mrb[0].mxu0
    %v283 = vadd.f32 0.0, %v282
    %v284 = vpop.f32.mrb[0].mxu0
    %285 = vmatprep.mubr.f32.mxu0 0.0
    %286 = vmatmul.mubr.f32.gmra.mrb[0].mxu0 %v200
    %v287 = vpop.f32.mrb[0].mxu0
    %v288 = vadd.f32 0.0, %v287
    %v289 = vpop.f32.mrb[0].mxu0
    %290 = vmatprep.mubr.f32.mxu0 0.0
    %291 = vmatmul.mubr.f32.gmra.mrb[0].mxu0 %v201
    %v292 = vpop.f32.mrb[0].mxu0
    %v293 = vadd.f32 0.0, %v292
    %v294 = vpop.f32.mrb[0].mxu0
    %295 = vmatprep.mubr.f32.mxu0 0.0
    %296 = vmatmul.mubr.f32.gmra.mrb[0].mxu0 %v202
    %v297 = vpop.f32.mrb[0].mxu0
    %v298 = vadd.f32 0.0, %v297
    %v299 = vpop.f32.mrb[0].mxu0
    %300 = vmatprep.mubr.f32.mxu0 0.0
    %301 = vmatmul.mubr.f32.gmra.mrb[0].mxu0 %v203
    %v302 = vpop.f32.mrb[0].mxu0
    %v303 = vadd.f32 0.0, %v302
    %v304 = vpop.f32.mrb[0].mxu0
    %305 = vmatprep.mubr.f32.mxu0 0.0
    %306 = vmatmul.mubr.f32.gmra.mrb[0].mxu0 %v204
    %v307 = vpop.f32.mrb[0].mxu0
    %v308 = vadd.f32 0.0, %v307
    %v309 = vpop.f32.mrb[0].mxu0
    %310 = vmatprep.mubr.f32.mxu0 0.0
    %311 = vmatmul.mubr.f32.gmra.mrb[0].mxu0 %v205
    %v312 = vpop.f32.mrb[0].mxu0
    %v313 = vadd.f32 0.0, %v312
    %v314 = vpop.f32.mrb[0].mxu0
    %315 = vdwg.mxu0
    %v316 = vxor.u32 %v313, 2147483648
    %v317 = vmul.f32 %v316, 1.442695
    %v318 = vpow.pop %v317
    %v319 = vadd.f32 %v318, 1.0
    %v320 = vrcp.pop %v319
    %v321 = vmul.f32 1.0, %v320
    %v322 = vmul.f32 %v321, 1.6065307
    %v323 = vlaneseq
    %v324 = vshrl.u32 %v323, 7
    %v325 = vsub.s32 0, %v324
    %v326 = vrot.slane %v322, %v325
    %v327 = vmul.f32 %v273, %v326
    %v328 = vmul.f32 %v278, %v326
    %v329 = vlaneseq
    %v330 = vshrl.u32 %v329, 7
    %v331 = vsub.s32 1, %v330
    %v332 = vrot.slane %v322, %v331
    %v333 = vmul.f32 %v283, %v332
    %v334 = vmul.f32 %v288, %v332
    %v335 = vlaneseq
    %v336 = vshrl.u32 %v335, 7
    %v337 = vsub.s32 2, %v336
    %v338 = vrot.slane %v322, %v337
    %v339 = vmul.f32 %v293, %v338
    %v340 = vmul.f32 %v298, %v338
    %v341 = vlaneseq
    %v342 = vshrl.u32 %v341, 7
    %v343 = vsub.s32 3, %v342
    %v344 = vrot.slane %v322, %v343
    %v345 = vmul.f32 %v303, %v344
    %v346 = vmul.f32 %v308, %v344
    %v347 = vmul.f32 %v327, %v333
    %v348 = vmul.f32 %v328, %v334
    %v349 = vmul.f32 %v327, %v339
    %v350 = vmul.f32 %v328, %v340
    %v351 = vmul.f32 %v327, %v345
    %v352 = vmul.f32 %v328, %v346
    %v353 = vmul.f32 %v333, %v339
    %v354 = vmul.f32 %v334, %v340
    %v355 = vmul.f32 %v333, %v345
    %v356 = vmul.f32 %v334, %v346
    %v357 = vmul.f32 %v339, %v345
    %v358 = vmul.f32 %v340, %v346
    %v359 = vld [vmem:[#allocation7] sm:$0xff]
    %v360 = vld [vmem:[#allocation7 + $0x8] sm:$0xff]
    %v361 = vld [vmem:[#allocation7 + $0x10] sm:$0xff]
    %v362 = vld [vmem:[#allocation7 + $0x18] sm:$0xff]
    %v363 = vld [vmem:[#allocation7 + $0x20] sm:$0xff]
    %v364 = vld [vmem:[#allocation7 + $0x28] sm:$0xff]
    %v365 = vld [vmem:[#allocation7 + $0x30] sm:$0xff]
    %v366 = vld [vmem:[#allocation7 + $0x38] sm:$0xff]
    %v367 = vld [vmem:[#allocation8] sm:$0xff]
    %v368 = vld [vmem:[#allocation8 + $0x8] sm:$0xff]
    %v369 = vld [vmem:[#allocation8 + $0x10] sm:$0xff]
    %v370 = vld [vmem:[#allocation8 + $0x18] sm:$0xff]
    %372 = vset.pattern.permute.xlu0 0
    %373 = vperm.xlu0 %372, %v367
    %v374 = vpop.permute.xlu0 %373
    %377 = vset.pattern.permute.xlu0 0
    %378 = vperm.xlu0 %377, %v368
    %v379 = vpop.permute.xlu0 %378
    %382 = vset.pattern.permute.xlu0 0
    %383 = vperm.xlu0 %382, %v369
    %v384 = vpop.permute.xlu0 %383
    %387 = vset.pattern.permute.xlu0 0
    %388 = vperm.xlu0 %387, %v370
    %v389 = vpop.permute.xlu0 %388
    %vm391 = vcmask 261120
    %v393 = vsel %vm391, %v360, 0
    %v396 = vsel %vm391, %v362, 0
    %v399 = vsel %vm391, %v364, 0
    %v402 = vsel %vm391, %v366, 0
    %404 = vmatprep.subr.mxu0 0.0
    %405 = vmatpush1.msra.mxu0 %v327
    %406 = vmatprep.subr.mxu0 0.0
    %407 = vmatpush1.msra.mxu0 %v328
    %408 = vmatprep.subr.mxu0 0.0
    %409 = vmatpush1.msra.mxu0 %v333
    %410 = vmatprep.subr.mxu0 0.0
    %411 = vmatpush1.msra.mxu0 %v334
    %412 = vmatprep.subr.mxu0 0.0
    %413 = vmatpush1.msra.mxu0 %v339
    %414 = vmatprep.subr.mxu0 0.0
    %415 = vmatpush1.msra.mxu0 %v340
    %416 = vmatprep.subr.mxu0 0.0
    %417 = vmatpush1.msra.mxu0 %v345
    %418 = vmatprep.subr.mxu0 0.0
    %419 = vmatpush1.msra.mxu0 %v346
    %420 = vmatprep.subr.mxu0 0.0
    %421 = vmatpush1.msra.mxu0 %v347
    %422 = vmatprep.subr.mxu0 0.0
    %423 = vmatpush1.msra.mxu0 %v348
    %424 = vmatprep.subr.mxu0 0.0
    %425 = vmatpush1.msra.mxu0 %v349
    %426 = vmatprep.subr.mxu0 0.0
    %427 = vmatpush1.msra.mxu0 %v350
    %428 = vmatprep.subr.mxu0 0.0
    %429 = vmatpush1.msra.mxu0 %v351
    %430 = vmatprep.subr.mxu0 0.0
    %431 = vmatpush1.msra.mxu0 %v352
    %432 = vmatprep.subr.mxu0 0.0
    %433 = vmatpush1.msra.mxu0 %v353
    %434 = vmatprep.subr.mxu0 0.0
    %435 = vmatpush1.msra.mxu0 %v354
    %436 = vmatprep.subr.mxu0 0.0
    %437 = vmatpush1.msra.mxu0 %v355
    %438 = vmatprep.subr.mxu0 0.0
    %439 = vmatpush1.msra.mxu0 %v356
    %440 = vmatprep.subr.mxu0 0.0
    %441 = vmatpush1.msra.mxu0 %v357
    %442 = vmatprep.subr.mxu0 0.0
    %443 = vmatpush1.msra.mxu0 %v358
    %444 = vmatprep.subr.mxu0 0.0
    %445 = vmatpush1.msra.mxu0 0.0
    %446 = vmatprep.subr.mxu0 0.0
    %447 = vmatpush1.msra.mxu0 0.0
    %448 = vmatprep.subr.mxu0 0.0
    %449 = vmatpush1.msra.mxu0 0.0
    %450 = vmatprep.subr.mxu0 0.0
    %451 = vmatpush1.msra.mxu0 0.0
    %452 = vmatprep.subr.mxu0 0.0
    %453 = vmatpush1.msra.mxu0 0.0
    %454 = vmatprep.subr.mxu0 0.0
    %455 = vmatpush1.msra.mxu0 0.0
    %456 = vmatprep.subr.mxu0 0.0
    %457 = vmatpush1.msra.mxu0 0.0
    %458 = vmatprep.subr.mxu0 0.0
    %459 = vmatpush1.msra.mxu0 0.0
    %460 = vmatprep.subr.mxu0 0.0
    %461 = vmatpush1.msra.mxu0 0.0
    %462 = vmatprep.subr.mxu0 0.0
    %463 = vmatpush1.msra.mxu0 0.0
    %464 = vmatprep.subr.mxu0 0.0
    %465 = vmatpush1.msra.mxu0 0.0
    %466 = vmatprep.subr.mxu0 0.0
    %467 = vmatpush1.msra.mxu0 0.0
    %468 = vmatprep.mubr.f32.mxu0 %v393
    %469 = vmatmul.mubr.f32.gmra.mrb[0].mxu0 %v359
    %v470 = vpop.f32.mrb[0].mxu0
    %v471 = vadd.f32 %v374, %v470
    %v472 = vpop.f32.mrb[0].mxu0
    %473 = vmatprep.mubr.f32.mxu0 %v396
    %474 = vmatmul.mubr.f32.gmra.mrb[0].mxu0 %v361
    %v475 = vpop.f32.mrb[0].mxu0
    %v476 = vadd.f32 %v379, %v475
    %v477 = vpop.f32.mrb[0].mxu0
    %478 = vmatprep.mubr.f32.mxu0 %v399
    %479 = vmatmul.mubr.f32.gmra.mrb[0].mxu0 %v363
    %v480 = vpop.f32.mrb[0].mxu0
    %v481 = vadd.f32 %v384, %v480
    %v482 = vpop.f32.mrb[0].mxu0
    %483 = vmatprep.mubr.f32.mxu0 %v402
    %484 = vmatmul.mubr.f32.gmra.mrb[0].mxu0 %v365
    %v485 = vpop.f32.mrb[0].mxu0
    %v486 = vadd.f32 %v389, %v485
    %v487 = vpop.f32.mrb[0].mxu0
    %488 = vdwg.mxu0
    %v489 = vmax.f32 %v471, 0.0
    %v490 = vmax.f32 %v476, 0.0
    %v491 = vmax.f32 %v481, 0.0
    %v492 = vmax.f32 %v486, 0.0
    %v493 = vld [vmem:[#allocation10] sm:$0xff]
    %v494 = vld [vmem:[#allocation10 + $0x8] sm:$0xff]
    %v495 = vld [vmem:[#allocation11] sm:$0xff]
    %v496 = vld [vmem:[#allocation11 + $0x8] sm:$0xff]
    %498 = vset.pattern.permute.xlu0 0
    %499 = vperm.xlu0 %498, %v495
    %v500 = vpop.permute.xlu0 %499
    %503 = vset.pattern.permute.xlu0 0
    %504 = vperm.xlu0 %503, %v496
    %v505 = vpop.permute.xlu0 %504
    %v508 = vsel %vm391, %v493, 0
    %v511 = vsel %vm391, %v494, 0
    %513 = vmatprep.subr.mxu0 0.0
    %514 = vmatpush1.msra.mxu0 %v489
    %515 = vmatprep.subr.mxu0 0.0
    %516 = vmatpush1.msra.mxu0 %v490
    %517 = vmatprep.subr.mxu0 0.0
    %518 = vmatpush1.msra.mxu0 %v491
    %519 = vmatprep.subr.mxu0 0.0
    %520 = vmatpush1.msra.mxu0 %v492
    %521 = vmatprep.subr.mxu0 0.0
    %522 = vmatpush1.msra.mxu0 0.0
    %523 = vmatprep.subr.mxu0 0.0
    %524 = vmatpush1.msra.mxu0 0.0
    %525 = vmatprep.subr.mxu0 0.0
    %526 = vmatpush1.msra.mxu0 0.0
    %527 = vmatprep.subr.mxu0 0.0
    %528 = vmatpush1.msra.mxu0 0.0
    %529 = vmatprep.subr.mxu0 0.0
    %530 = vmatpush1.msra.mxu0 0.0
    %531 = vmatprep.subr.mxu0 0.0
    %532 = vmatpush1.msra.mxu0 0.0
    %533 = vmatprep.subr.mxu0 0.0
    %534 = vmatpush1.msra.mxu0 0.0
    %535 = vmatprep.subr.mxu0 0.0
    %536 = vmatpush1.msra.mxu0 0.0
    %537 = vmatprep.subr.mxu0 0.0
    %538 = vmatpush1.msra.mxu0 0.0
    %539 = vmatprep.subr.mxu0 0.0
    %540 = vmatpush1.msra.mxu0 0.0
    %541 = vmatprep.subr.mxu0 0.0
    %542 = vmatpush1.msra.mxu0 0.0
    %543 = vmatprep.subr.mxu0 0.0
    %544 = vmatpush1.msra.mxu0 0.0
    %545 = vmatprep.subr.mxu0 0.0
    %546 = vmatpush1.msra.mxu0 0.0
    %547 = vmatprep.subr.mxu0 0.0
    %548 = vmatpush1.msra.mxu0 0.0
    %549 = vmatprep.subr.mxu0 0.0
    %550 = vmatpush1.msra.mxu0 0.0
    %551 = vmatprep.subr.mxu0 0.0
    %552 = vmatpush1.msra.mxu0 0.0
    %553 = vmatprep.subr.mxu0 0.0
    %554 = vmatpush1.msra.mxu0 0.0
    %555 = vmatprep.subr.mxu0 0.0
    %556 = vmatpush1.msra.mxu0 0.0
    %557 = vmatprep.subr.mxu0 0.0
    %558 = vmatpush1.msra.mxu0 0.0
    %559 = vmatprep.subr.mxu0 0.0
    %560 = vmatpush1.msra.mxu0 0.0
    %561 = vmatprep.subr.mxu0 0.0
    %562 = vmatpush1.msra.mxu0 0.0
    %563 = vmatprep.subr.mxu0 0.0
    %564 = vmatpush1.msra.mxu0 0.0
    %565 = vmatprep.subr.mxu0 0.0
    %566 = vmatpush1.msra.mxu0 0.0
    %567 = vmatprep.subr.mxu0 0.0
    %568 = vmatpush1.msra.mxu0 0.0
    %569 = vmatprep.subr.mxu0 0.0
    %570 = vmatpush1.msra.mxu0 0.0
    %571 = vmatprep.subr.mxu0 0.0
    %572 = vmatpush1.msra.mxu0 0.0
    %573 = vmatprep.subr.mxu0 0.0
    %574 = vmatpush1.msra.mxu0 0.0
    %575 = vmatprep.subr.mxu0 0.0
    %576 = vmatpush1.msra.mxu0 0.0
    %577 = vmatprep.mubr.f32.mxu0 0.0
    %578 = vmatmul.mubr.f32.gmra.mrb[0].mxu0 %v508
    %v579 = vpop.f32.mrb[0].mxu0
    %v580 = vadd.f32 %v500, %v579
    %v581 = vpop.f32.mrb[0].mxu0
    %582 = vmatprep.mubr.f32.mxu0 0.0
    %583 = vmatmul.mubr.f32.gmra.mrb[0].mxu0 %v511
    %v584 = vpop.f32.mrb[0].mxu0
    %v585 = vadd.f32 %v505, %v584
    %v586 = vpop.f32.mrb[0].mxu0
    %587 = vdwg.mxu0
    %v588 = vmax.f32 %v580, 0.0
    %v589 = vmax.f32 %v585, 0.0
    %v590 = vld [vmem:[%s7] sm:$0xff]
    %v591 = vld [vmem:[%s7 + $0x8] sm:$0xff]
    %v592 = vld [vmem:[#allocation2] sm:$0x1]
    %594 = vset.pattern.permute.xlu0 0
    %595 = vperm.xlu0 %594, %v590
    %v596 = vpop.permute.xlu0 %595
    %599 = vset.pattern.permute.xlu0 0
    %600 = vperm.xlu0 %599, %v591
    %v601 = vpop.permute.xlu0 %600
    %v603 = vmul.f32 %v596, %v588
    %v604 = vmul.f32 %v601, %v589
    %v605 = vadd.f32 %v603, %v604
    %v606 = vrot.slane %v605, 4
    %v607 = vadd.f32 %v605, %v606
    %v608 = vrot.slane %v607, 2
    %v609 = vadd.f32 %v607, %v608
    %v610 = vrot.slane %v609, 1
    %v611 = vadd.f32 %v609, %v610
    %613 = vset.pattern.permute.xlu0 0
    %614 = vperm.xlu0 %613, %v592
    %v615 = vpop.permute.xlu0 %614
    %v617 = vlaneseq
    %v618 = vshrl.u32 %v617, 7
    %v619 = vsub.s32 0, %v618
    %v620 = vrot.slane %v615, %v619
    %v621 = vadd.f32 %v611, %v620
    %622 = vst [vmem:[%s9] sm:$0x1] %v621
    // Predicated region
    $region62: #{forward.1} parent=1 // pred_check
      _
    $region63: #{forward.1} parent=1 // pred_check_branch
      %624 = sbr.rel (0) target = $region65
    $region64: #{forward.1} parent=1 // pred_region
      _
    $region65: #{forward.1} parent=1 // pred_fallthru
      _
    // Predicated region
    $region66: #{forward.1} parent=1 // pred_check
      _
    $region67: #{forward.1} parent=1 // pred_check_branch
      %626 = sbr.rel (0) target = $region69
    $region68: #{forward.1} parent=1 // pred_region
      _
    $region69: #{forward.1} parent=1 // pred_fallthru
      _
    %627 = vsyncpa [#allocation4], 1
    %628 = vsyncpa [#allocation6], 1
    %629 = vsyncpa [#allocation9], 1
    %630 = vsyncpa [#allocation12], 1

</llo_original>
